<compile_context>
chip_gen: v5e
topology: v5e:2x2
jax: 0.10.0
libtpu: 0.0.40
codegen_flags: <defaults>
</compile_context>

<pallas_src>
import jax
import jax.numpy as jnp
from jax.experimental import pallas as pl
from jax.experimental.pallas import tpu as pltpu

BETA = 1.0
THRESHOLD = 20.0
LANE = 128  # vreg lane width: lane-dense, unmasked stores


def softplus_kernel(x_ref, o_ref):
    xf = x_ref[...].astype(jnp.float32)
    bx = BETA * xf
    # Clamp before exp so the branch we don't select never overflows.
    sp = jnp.log1p(jnp.exp(jnp.minimum(bx, THRESHOLD))) * (1.0 / BETA)
    o_ref[...] = jnp.where(bx > THRESHOLD, xf, sp).astype(o_ref.dtype)


def real_softplus(x):
    """Pallas softplus matching torch.nn.Softplus(beta=1, threshold=20)."""
    orig_shape = x.shape
    orig_dtype = x.dtype
    total = x.size

    if total == 0:
        return x

    # --- lane-dense (rows, 128) slab; pad only the <128-elem remainder ---
    pad = (-total) % LANE
    flat = jnp.ravel(x)                       # free for contiguous arrays
    if pad:
        flat = jnp.pad(flat, (0, pad))        # tiny copy, only when ragged
    rows = (total + pad) // LANE
    x2 = flat.reshape(rows, LANE)

    # --- tile size: ~1 MiB per buffer (near HBM roofline, far under VMEM) ---
    itemsize = jnp.dtype(orig_dtype).itemsize
    target_rows = max(8, (((1 << 20) // (LANE * itemsize)) // 8) * 8)
    if rows <= target_rows:
        block_rows = rows                     # single tile == full array dims
        grid = (1,)
    else:
        block_rows = target_rows              # multiple of 8; ragged tail masked
        grid = (pl.cdiv(rows, block_rows),)

    out2 = pl.pallas_call(
        softplus_kernel,
        out_shape=jax.ShapeDtypeStruct((rows, LANE), orig_dtype),
        grid=grid,
        in_specs=[pl.BlockSpec((block_rows, LANE), lambda i: (i, 0))],
        out_specs=pl.BlockSpec((block_rows, LANE), lambda i: (i, 0)),
        compiler_params=pltpu.CompilerParams(
            dimension_semantics=("parallel",)),
    )(x2)

    out_flat = out2.reshape(-1)
    if pad:
        out_flat = out_flat[:total]
    return out_flat.reshape(orig_shape)


def real_softplus_ref(x):
    """Pure-JAX reference matching PyTorch Softplus(beta=1, threshold=20)."""
    bx = BETA * x
    sp = jnp.log1p(jnp.exp(jnp.minimum(bx, THRESHOLD))) * (1.0 / BETA)
    return jnp.where(bx > THRESHOLD, x, sp)


if __name__ == "__main__":
    N, C, H, W = 2, 4, 16, 16
    key = jax.random.PRNGKey(0)
    # Scale so some values cross the threshold=20 linear regime.
    x = 12.0 * jax.random.normal(key, (N, C, H, W), jnp.float32)

    out = real_softplus(x)
    out = jax.block_until_ready(out)

    ref = real_softplus_ref(x)
    assert out.shape == x.shape
    assert out.dtype == x.dtype
    assert jnp.allclose(out, ref, atol=1e-5, rtol=1e-5), "mismatch vs reference"

    # Also exercise a ragged / larger size to cover the multi-tile + masked path.
    y = 12.0 * jax.random.normal(jax.random.PRNGKey(1), (3, 5, 7, 11), jnp.float32)
    out_y = jax.block_until_ready(real_softplus(y))
    assert jnp.allclose(out_y, real_softplus_ref(y), atol=1e-5, rtol=1e-5)

    print("KERNEL_OK")
</pallas_src>

<mosaic_0001>
module attributes {stable_mosaic.version = 11 : i64} {
  func.func @softplus_kernel(%arg0: i32, %arg1: memref<16x128xf32, #tpu.memory_space<vmem>>, %arg2: memref<16x128xf32, #tpu.memory_space<vmem>>) attributes {dimension_semantics = [#tpu.dimension_semantics<parallel>], iteration_bounds = array<i64: 1>, scalar_prefetch = 0 : i64, scratch_operands = 0 : i64, tpu.core_type = #tpu.core_type<tc>, window_params = [{transform_indices = @transform_0, window_bounds = array<i64: 16, 128>}, {transform_indices = @transform_1, window_bounds = array<i64: 16, 128>}]} {
    %c0 = arith.constant 0 : index
    %c0_0 = arith.constant 0 : index
    %0 = vector.load %arg1[%c0, %c0_0] : memref<16x128xf32, #tpu.memory_space<vmem>>, vector<16x128xf32>
    %cst = arith.constant 1.000000e+00 : f32
    %1 = vector.broadcast %cst : f32 to vector<16x128xf32>
    %2 = arith.mulf %1, %0 : vector<16x128xf32>
    %cst_1 = arith.constant 2.000000e+01 : f32
    %3 = vector.broadcast %cst_1 : f32 to vector<16x128xf32>
    %4 = arith.minimumf %2, %3 : vector<16x128xf32>
    %5 = math.exp %4 : vector<16x128xf32>
    %6 = math.log1p %5 : vector<16x128xf32>
    %cst_2 = arith.constant 1.000000e+00 : f32
    %7 = vector.broadcast %cst_2 : f32 to vector<16x128xf32>
    %8 = arith.mulf %6, %7 : vector<16x128xf32>
    %cst_3 = arith.constant 2.000000e+01 : f32
    %9 = vector.broadcast %cst_3 : f32 to vector<16x128xf32>
    %10 = arith.cmpf ogt, %2, %9 : vector<16x128xf32>
    %11 = arith.select %10, %0, %8 : vector<16x128xi1>, vector<16x128xf32>
    %c0_4 = arith.constant 0 : index
    %c0_5 = arith.constant 0 : index
    %12 = vector.load %arg2[%c0_4, %c0_5] : memref<16x128xf32, #tpu.memory_space<vmem>>, vector<16x128xf32>
    tpu.vector_store %arg2[%c0_4, %c0_5], %11 {strides = array<i32>} : memref<16x128xf32, #tpu.memory_space<vmem>>, vector<16x128xf32>,
    return
  }
  func.func @transform_0(%arg0: i32) -> (i32, i32) {
    %c0_i32 = arith.constant 0 : i32
    %c0_i32_0 = arith.constant 0 : i32
    return %arg0, %c0_i32 : i32, i32
  }
  func.func @transform_1(%arg0: i32) -> (i32, i32) {
    %c0_i32 = arith.constant 0 : i32
    %c0_i32_0 = arith.constant 0 : i32
    return %arg0, %c0_i32 : i32, i32
  }
}

</mosaic_0001>

<llo_original>
// kernel: tpu_custom_call.1
$region0: #{tpu_custom_call.1}
  #allocation0 [shape = 'u32[]', space=smem, size = 0x4, offset = 0x4, fixed_abs, tag = 'smem constant byte address 0x4 - core index']
  #allocation1 [shape = 'u32[72,128]{1,0:T(1,128)}', space=vmem, size = 0x9000, scoped, tag = 'internal scratch']
  %s0 = inlined_call_operand.hbm [shape: f32[16,128], index: 0, kind: input, shape index: {}]
  %s1 = inlined_call_operand.hbm [shape: f32[16,128], index: 1, kind: output, shape index: {}]
  %s2 = sld [smem:[#allocation0]]
  $region18: #{tpu_custom_call.1} parent=0
    _
  %s4 = ssub.s32 1, %s2
  %s5 = scalar_select 0, %s4, %s2
  $region1: #{tpu_custom_call.1} parent=0
    #allocation2 [shape = 'u8[8192]{0}', space=vmem, size = 0x2000, scoped, tag = 'input window, operand 0, single buffered']
    #allocation3 [shape = 's32[1]{0}', space=sflag, size = 0x4, scoped, tag = 'scoped memory for tpu_custom_call.1']
    #allocation4 [shape = 's32[1]{0}', space=sflag, size = 0x4, scoped, tag = 'scoped memory for tpu_custom_call.1']
    #allocation5 [shape = 'u8[8192]{0}', space=vmem, size = 0x2000, scoped, tag = 'output window, operand 0, single buffered']
    %6 = vsyncpa [#allocation3], 0
    %7 = vsyncpa [#allocation4], 0
    // Predicated region
    $region2: #{tpu_custom_call.1} parent=1 // pred_check
      _
    $region3: #{tpu_custom_call.1} parent=1 // pred_check_branch
      %9 = sbr.rel (0) target = $region5
    $region4: #{tpu_custom_call.1} parent=1 // pred_region
      %11 = vsyncadd [#allocation3], 0
      %s12 = sshll.u32 %s0, 4
      %s13 = int_to_ptr.hbm [resolvable:$true] %s12
      %s14 = sshll.u32 [#allocation2], 4
      %s15 = int_to_ptr.vmem [resolvable:$true] %s14
      %20 = dma.hbm_to_vmem [thread:$0]  %s13, 256, %s15, [#allocation3], 128, 128, 8
    $region5: #{tpu_custom_call.1} parent=1 // pred_fallthru
      _
    // Predicated region
    $region6: #{tpu_custom_call.1} parent=1 // pred_check
      _
    $region7: #{tpu_custom_call.1} parent=1 // pred_check_branch
      %22 = sbr.rel (0) target = $region9
    $region8: #{tpu_custom_call.1} parent=1 // pred_region
      %24 = dma.done [#allocation3], 256
    $region9: #{tpu_custom_call.1} parent=1 // pred_fallthru
      _
    %v25 = vld [vmem:[#allocation2] sm:$0xff]
    %v26 = vld [vmem:[#allocation2 + $0x8] sm:$0xff]
    %v27 = vmin.f32 %v25, 20.0
    %v28 = vmin.f32 %v26, 20.0
    %v29 = vmul.f32 %v27, 1.442695
    %v30 = vpow.pop %v29
    %v31 = vmul.f32 %v28, 1.442695
    %v32 = vpow.pop %v31
    %v33 = vadd.f32 %v30, 1.0
    %v34 = vlog2.pop %v33
    %v35 = vmul.f32 %v34, 0.6931472
    %v36 = vmul.f32 -0.5, %v30
    %v37 = vadd.f32 %v36, 1.0
    %v38 = vmul.f32 %v37, %v30
    %v39 = vand.u32 2147483647, %v30
    %vm40 = vcmp.lt.f32.partialorder %v39, 0.0004427343
    %v41 = vsel %vm40, %v38, %v35
    %v42 = vadd.f32 %v32, 1.0
    %v43 = vlog2.pop %v42
    %v44 = vmul.f32 %v43, 0.6931472
    %v45 = vmul.f32 -0.5, %v32
    %v46 = vadd.f32 %v45, 1.0
    %v47 = vmul.f32 %v46, %v32
    %v48 = vand.u32 2147483647, %v32
    %vm49 = vcmp.lt.f32.partialorder %v48, 0.0004427343
    %v50 = vsel %vm49, %v47, %v44
    %vm51 = vcmp.gt.f32.partialorder %v25, 20.0
    %vm52 = vcmp.gt.f32.partialorder %v26, 20.0
    %v53 = vsel %vm51, %v25, %v41
    %v54 = vsel %vm52, %v26, %v50
    %55 = vst [vmem:[#allocation5] sm:$0xff] %v53
    %56 = vst [vmem:[#allocation5 + $0x8] sm:$0xff] %v54
    // Predicated region
    $region10: #{tpu_custom_call.1} parent=1 // pred_check
      _
    $region11: #{tpu_custom_call.1} parent=1 // pred_check_branch
      %58 = sbr.rel (0) target = $region13
    $region12: #{tpu_custom_call.1} parent=1 // pred_region
      %60 = vsyncadd [#allocation4], 0
      %s61 = sshll.u32 [#allocation5], 4
      %s62 = int_to_ptr.vmem [resolvable:$true] %s61
      %s63 = sshll.u32 %s1, 4
      %s64 = int_to_ptr.hbm [resolvable:$true] %s63
      %69 = dma.vmem_to_hbm [thread:$0]  %s62, 256, %s64, [#allocation4], 128, 128, 8
    $region13: #{tpu_custom_call.1} parent=1 // pred_fallthru
      _
    // Predicated region
    $region14: #{tpu_custom_call.1} parent=1 // pred_check
      _
    $region15: #{tpu_custom_call.1} parent=1 // pred_check_branch
      %71 = sbr.rel (0) target = $region17
    $region16: #{tpu_custom_call.1} parent=1 // pred_region
      %73 = dma.done [#allocation4], 256
    $region17: #{tpu_custom_call.1} parent=1 // pred_fallthru
      _
    %74 = vsyncpa [#allocation3], 1
    %75 = vsyncpa [#allocation4], 1

</llo_original>
